<compile_context>
chip_gen: v7x
topology: tpu7x:2x2x1
jax: 0.10.0
libtpu: 0.0.40
codegen_flags: <defaults>
</compile_context>

<pallas_src>
import jax
import jax.numpy as jnp
from jax import lax
from jax.experimental import pallas as pl
from jax.experimental.pallas import tpu as pltpu
import numpy as np

_EPS = 1e-5  # PyTorch instance_norm default eps


def _round_up(x, m):
    return ((x + m - 1) // m) * m


def _make_kernel(c_att_p, c_out_p, c_att, v):
    inv_v = 1.0 / float(v)
    inv_c = 1.0 / float(c_att)   # mean over the *original* channel count

    def _inorm_1pass(x):
        # Single-pass per-channel (lane-axis) instance norm: sum + sum-of-squares.
        s = jnp.sum(x, axis=-1, keepdims=True)
        ss = jnp.sum(x * x, axis=-1, keepdims=True)
        mu = s * inv_v
        var = jnp.maximum(ss * inv_v - mu * mu, 0.0)
        return (x - mu) * lax.rsqrt(var + _EPS)

    def kernel(src_ref, tgt_ref, ws_ref, wt_ref, bv_ref, out_ref):
        # Blocks: src/tgt (1, C_in, V) in caller dtype; fed to the MXU directly.
        src = src_ref[0]                                        # (C_in, V)
        tgt = tgt_ref[0]                                        # (C_in, V)

        # Fused conv_q / conv_k / conv_v (value path already folds tgt - src
        # via -Wv / +Wv).  f32 accumulation on the MXU.
        qkv = (jnp.dot(ws_ref[...], src, preferred_element_type=jnp.float32)
               + jnp.dot(wt_ref[...], tgt, preferred_element_type=jnp.float32))

        # Sublane-aligned row slices (c_att_p, c_out_p are multiples of 8).
        qn = _inorm_1pass(qkv[:c_att_p])
        kn = _inorm_1pass(qkv[c_att_p:2 * c_att_p])

        # alpha = |mean over channels(qn * kn)|; padded rows contribute zeros.
        alpha = jnp.abs(jnp.sum(qn * kn, axis=0, keepdims=True) * inv_c)
        gate = jnp.clip(1.0 - alpha, 0.0, 1.0)                  # (1, V)

        # value (with its bias), gated, then ReLU — no separate `val` slab kept.
        feat = jnp.maximum(gate * (qkv[2 * c_att_p:] + bv_ref[...]), 0.0)

        # Final instance norm: two-pass stats (this feeds the output directly).
        mu = jnp.sum(feat, axis=-1, keepdims=True) * inv_v
        d = feat - mu
        var = jnp.sum(d * d, axis=-1, keepdims=True) * inv_v
        out_ref[0] = (d * lax.rsqrt(var + _EPS)).astype(out_ref.dtype)

    return kernel


def attention_block(source, target, params):
    """source/target: (N, C_in, D, H, W) float. Returns (N, C_out, D, H, W)."""
    N, C_in, D, H, W = source.shape
    V = D * H * W
    io_dtype = source.dtype

    wq = params["wq"].astype(jnp.float32)
    wk = params["wk"].astype(jnp.float32)
    wv = params["wv"].astype(jnp.float32)
    bv = params["bv"].astype(jnp.float32)
    C_att = wq.shape[0]
    C_out = wv.shape[0]

    # Pad the attention / output channel counts to multiples of 8 so the
    # in-kernel qkv row slices are sublane-tile aligned.  Padded rows are zero.
    C_att_p = _round_up(C_att, 8)
    C_out_p = _round_up(C_out, 8)
    C_qkv_p = 2 * C_att_p + C_out_p

    def _pad_rows(w, rows):
        return jnp.pad(w, ((0, rows - w.shape[0]), (0, 0)))

    wq_p = _pad_rows(wq, C_att_p)
    wk_p = _pad_rows(wk, C_att_p)
    wv_p = _pad_rows(wv, C_out_p)
    bv_p = _pad_rows(bv, C_out_p)                                # (C_out_p, 1) f32
    z_att = jnp.zeros((C_att_p, C_in), jnp.float32)

    # Fused weights, cast to the caller dtype so the MXU sees native-width
    # operands (bf16 callers avoid any f32 upcast of the activations).
    # bq / bk are intentionally dropped (cancelled by the instance norms).
    w_src = jnp.concatenate([wq_p, z_att, -wv_p], axis=0).astype(io_dtype)
    w_tgt = jnp.concatenate([z_att, wk_p, wv_p], axis=0).astype(io_dtype)

    src = source.reshape(N, C_in, V)
    tgt = target.reshape(N, C_in, V)

    # Per-grid-step VMEM high-water estimate (bytes):
    #   src + tgt blocks double-buffered, output block double-buffered, plus
    #   the f32 live set: qkv, qn+kn, feat + centered diff, alpha/gate/stats.
    in_bytes = jnp.dtype(io_dtype).itemsize
    est = V * (4 * C_in * in_bytes                 # src + tgt, double-buffered
               + 2 * C_out_p * in_bytes            # output, double-buffered
               + 4 * (C_qkv_p                      # qkv accumulator
                      + 2 * C_att_p                # qn / kn
                      + 2 * C_out_p                # feat + centered diff
                      + 4))                        # alpha / gate / stat rows
    # Generation-aware cap: v5e/v6e have 128 MiB physical VMEM, v7x only 64 MiB.
    try:
        phys_vmem = pltpu.get_tpu_info().vmem_capacity_bytes
    except Exception:  # pragma: no cover - conservative fallback
        phys_vmem = 128 * 1024 * 1024
    cap = min(int(phys_vmem * 0.85), 112 * 1024 * 1024)
    vmem_limit = int(min(max(2 * est, 32 * 1024 * 1024), cap))

    out = pl.pallas_call(
        _make_kernel(C_att_p, C_out_p, C_att, V),
        out_shape=jax.ShapeDtypeStruct((N, C_out_p, V), io_dtype),
        grid_spec=pltpu.PrefetchScalarGridSpec(
            num_scalar_prefetch=0,
            grid=(N,),
            in_specs=[
                pl.BlockSpec((1, C_in, V), lambda n: (n, 0, 0)),       # source
                pl.BlockSpec((1, C_in, V), lambda n: (n, 0, 0)),       # target
                pl.BlockSpec((C_qkv_p, C_in), lambda n: (0, 0)),       # W_src
                pl.BlockSpec((C_qkv_p, C_in), lambda n: (0, 0)),       # W_tgt
                pl.BlockSpec((C_out_p, 1), lambda n: (0, 0)),          # bv
            ],
            out_specs=pl.BlockSpec((1, C_out_p, V), lambda n: (n, 0, 0)),
        ),
        compiler_params=pltpu.CompilerParams(
            dimension_semantics=("parallel",),
            vmem_limit_bytes=vmem_limit),
    )(src, tgt, w_src, w_tgt, bv_p)

    if C_out_p != C_out:
        out = out[:, :C_out]
    return out.reshape(N, C_out, D, H, W)


def reference_attention_block(source, target, params):
    """Plain-JAX reference (full PyTorch semantics, including bq/bk)."""
    N, C_in, D, H, W = source.shape
    V = D * H * W
    src = source.reshape(N, C_in, V).astype(jnp.float32)
    tgt = target.reshape(N, C_in, V).astype(jnp.float32)

    def conv1(w, b, x):                       # (Co,Ci) @ (N,Ci,V) + (Co,1)
        return jnp.einsum("oc,ncv->nov", w, x) + b[None]

    def inorm(x):
        mu = jnp.mean(x, axis=-1, keepdims=True)
        var = jnp.mean((x - mu) ** 2, axis=-1, keepdims=True)
        return (x - mu) / jnp.sqrt(var + _EPS)

    q = inorm(conv1(params["wq"], params["bq"], src))
    k = inorm(conv1(params["wk"], params["bk"], tgt))
    v = conv1(params["wv"], params["bv"], tgt - src)
    alpha = jnp.abs(jnp.mean(q * k, axis=1, keepdims=True))
    feat = jnp.clip(1.0 - alpha, 0.0, 1.0) * v
    out = inorm(jnp.maximum(feat, 0.0))
    C_out = params["wv"].shape[0]
    return out.reshape(N, C_out, D, H, W)


def init_params(key, filters_in, filters_out, filters_att):
    ks = jax.random.split(key, 6)
    scale = 1.0 / np.sqrt(filters_in)
    return {
        "wq": jax.random.uniform(ks[0], (filters_att, filters_in), jnp.float32,
                                 -scale, scale),
        "bq": jax.random.uniform(ks[1], (filters_att, 1), jnp.float32,
                                 -scale, scale),
        "wk": jax.random.uniform(ks[2], (filters_att, filters_in), jnp.float32,
                                 -scale, scale),
        "bk": jax.random.uniform(ks[3], (filters_att, 1), jnp.float32,
                                 -scale, scale),
        "wv": jax.random.uniform(ks[4], (filters_out, filters_in), jnp.float32,
                                 -scale, scale),
        "bv": jax.random.uniform(ks[5], (filters_out, 1), jnp.float32,
                                 -scale, scale),
    }


if __name__ == "__main__":
    key = jax.random.PRNGKey(0)
    k_src, k_tgt, k_par = jax.random.split(key, 3)

    N, C_in, C_att, C_out = 2, 4, 8, 8
    D, H, W = 8, 8, 8          # V = 512 (lane-friendly)

    source = jax.random.normal(k_src, (N, C_in, D, H, W), jnp.float32)
    target = jax.random.normal(k_tgt, (N, C_in, D, H, W), jnp.float32)
    params = init_params(k_par, C_in, C_out, C_att)

    out = attention_block(source, target, params)
    out = jax.block_until_ready(out)

    ref = jax.block_until_ready(reference_attention_block(source, target, params))
    assert out.shape == (N, C_out, D, H, W)
    # Note: the reference applies bq/bk; the kernel drops them because the
    # following instance norm cancels per-channel constant biases exactly.
    np.testing.assert_allclose(np.asarray(out), np.asarray(ref),
                               rtol=1e-3, atol=1e-3)

    print("KERNEL_OK")
</pallas_src>

<mosaic_0001>
module attributes {stable_mosaic.version = 11 : i64} {
  func.func @kernel(%arg0: i32, %arg1: memref<1x4x512xf32, #tpu.memory_space<vmem>>, %arg2: memref<1x4x512xf32, #tpu.memory_space<vmem>>, %arg3: memref<24x4xf32, #tpu.memory_space<vmem>>, %arg4: memref<24x4xf32, #tpu.memory_space<vmem>>, %arg5: memref<8x1xf32, #tpu.memory_space<vmem>>, %arg6: memref<1x8x512xf32, #tpu.memory_space<vmem>>) attributes {dimension_semantics = [#tpu.dimension_semantics<parallel>], iteration_bounds = array<i64: 2>, scalar_prefetch = 0 : i64, scratch_operands = 0 : i64, tpu.core_type = #tpu.core_type<tc>, window_params = [{transform_indices = @transform_0, window_bounds = array<i64: 1, 4, 512>}, {transform_indices = @transform_1, window_bounds = array<i64: 1, 4, 512>}, {pipeline_mode = #tpu.pipeline_mode<synchronous>, transform_indices = @transform_2, window_bounds = array<i64: 24, 4>}, {pipeline_mode = #tpu.pipeline_mode<synchronous>, transform_indices = @transform_3, window_bounds = array<i64: 24, 4>}, {pipeline_mode = #tpu.pipeline_mode<synchronous>, transform_indices = @transform_4, window_bounds = array<i64: 8, 1>}, {transform_indices = @transform_5, window_bounds = array<i64: 1, 8, 512>}]} {
    %c0 = arith.constant 0 : index
    %c0_0 = arith.constant 0 : index
    %c0_1 = arith.constant 0 : index
    %0 = vector.load %arg1[%c0, %c0_0, %c0_1] : memref<1x4x512xf32, #tpu.memory_space<vmem>>, vector<1x4x512xf32>
    %1 = vector.shape_cast %0 : vector<1x4x512xf32> to vector<4x512xf32>
    %c0_2 = arith.constant 0 : index
    %c0_3 = arith.constant 0 : index
    %c0_4 = arith.constant 0 : index
    %2 = vector.load %arg2[%c0_2, %c0_3, %c0_4] : memref<1x4x512xf32, #tpu.memory_space<vmem>>, vector<1x4x512xf32>
    %3 = vector.shape_cast %2 : vector<1x4x512xf32> to vector<4x512xf32>
    %c0_5 = arith.constant 0 : index
    %c0_6 = arith.constant 0 : index
    %4 = vector.load %arg3[%c0_5, %c0_6] : memref<24x4xf32, #tpu.memory_space<vmem>>, vector<24x4xf32>
    %cst = arith.constant dense<0.000000e+00> : vector<24x512xf32>
    %5 = tpu.matmul %4, %1, %cst {dimension_numbers = #tpu.dot_dimension_numbers<[1], [0], [0], [1], [0, 0, 1, 1], [], []>} : vector<24x4xf32>, vector<4x512xf32>, vector<24x512xf32> -> vector<24x512xf32>
    %c0_7 = arith.constant 0 : index
    %c0_8 = arith.constant 0 : index
    %6 = vector.load %arg4[%c0_7, %c0_8] : memref<24x4xf32, #tpu.memory_space<vmem>>, vector<24x4xf32>
    %cst_9 = arith.constant dense<0.000000e+00> : vector<24x512xf32>
    %7 = tpu.matmul %6, %3, %cst_9 {dimension_numbers = #tpu.dot_dimension_numbers<[1], [0], [0], [1], [0, 0, 1, 1], [], []>} : vector<24x4xf32>, vector<4x512xf32>, vector<24x512xf32> -> vector<24x512xf32>
    %8 = arith.addf %5, %7 : vector<24x512xf32>
    %9 = vector.extract_strided_slice %8 {offsets = [0, 0], sizes = [8, 512], strides = [1, 1]} : vector<24x512xf32> to vector<8x512xf32>
    %cst_10 = arith.constant dense<0.000000e+00> : vector<8xf32>
    %10 = vector.multi_reduction <add>, %9, %cst_10 [1] : vector<8x512xf32> to vector<8xf32>
    %11 = vector.shape_cast %10 : vector<8xf32> to vector<8x1xf32>
    %12 = arith.mulf %9, %9 : vector<8x512xf32>
    %cst_11 = arith.constant dense<0.000000e+00> : vector<8xf32>
    %13 = vector.multi_reduction <add>, %12, %cst_11 [1] : vector<8x512xf32> to vector<8xf32>
    %14 = vector.shape_cast %13 : vector<8xf32> to vector<8x1xf32>
    %cst_12 = arith.constant 0.001953125 : f32
    %15 = vector.broadcast %cst_12 : f32 to vector<8x1xf32>
    %16 = arith.mulf %11, %15 : vector<8x1xf32>
    %cst_13 = arith.constant 0.001953125 : f32
    %17 = vector.broadcast %cst_13 : f32 to vector<8x1xf32>
    %18 = arith.mulf %14, %17 : vector<8x1xf32>
    %19 = arith.mulf %16, %16 : vector<8x1xf32>
    %20 = arith.subf %18, %19 : vector<8x1xf32>
    %cst_14 = arith.constant 0.000000e+00 : f32
    %21 = vector.broadcast %cst_14 : f32 to vector<8x1xf32>
    %22 = arith.maximumf %20, %21 : vector<8x1xf32>
    %23 = vector.broadcast %16 : vector<8x1xf32> to vector<8x512xf32>
    %24 = arith.subf %9, %23 : vector<8x512xf32>
    %cst_15 = arith.constant 9.99999974E-6 : f32
    %25 = vector.broadcast %cst_15 : f32 to vector<8x1xf32>
    %26 = arith.addf %22, %25 : vector<8x1xf32>
    %27 = math.rsqrt %26 : vector<8x1xf32>
    %28 = vector.broadcast %27 : vector<8x1xf32> to vector<8x512xf32>
    %29 = arith.mulf %24, %28 : vector<8x512xf32>
    %30 = vector.extract_strided_slice %8 {offsets = [8, 0], sizes = [8, 512], strides = [1, 1]} : vector<24x512xf32> to vector<8x512xf32>
    %cst_16 = arith.constant dense<0.000000e+00> : vector<8xf32>
    %31 = vector.multi_reduction <add>, %30, %cst_16 [1] : vector<8x512xf32> to vector<8xf32>
    %32 = vector.shape_cast %31 : vector<8xf32> to vector<8x1xf32>
    %33 = arith.mulf %30, %30 : vector<8x512xf32>
    %cst_17 = arith.constant dense<0.000000e+00> : vector<8xf32>
    %34 = vector.multi_reduction <add>, %33, %cst_17 [1] : vector<8x512xf32> to vector<8xf32>
    %35 = vector.shape_cast %34 : vector<8xf32> to vector<8x1xf32>
    %cst_18 = arith.constant 0.001953125 : f32
    %36 = vector.broadcast %cst_18 : f32 to vector<8x1xf32>
    %37 = arith.mulf %32, %36 : vector<8x1xf32>
    %cst_19 = arith.constant 0.001953125 : f32
    %38 = vector.broadcast %cst_19 : f32 to vector<8x1xf32>
    %39 = arith.mulf %35, %38 : vector<8x1xf32>
    %40 = arith.mulf %37, %37 : vector<8x1xf32>
    %41 = arith.subf %39, %40 : vector<8x1xf32>
    %cst_20 = arith.constant 0.000000e+00 : f32
    %42 = vector.broadcast %cst_20 : f32 to vector<8x1xf32>
    %43 = arith.maximumf %41, %42 : vector<8x1xf32>
    %44 = vector.broadcast %37 : vector<8x1xf32> to vector<8x512xf32>
    %45 = arith.subf %30, %44 : vector<8x512xf32>
    %cst_21 = arith.constant 9.99999974E-6 : f32
    %46 = vector.broadcast %cst_21 : f32 to vector<8x1xf32>
    %47 = arith.addf %43, %46 : vector<8x1xf32>
    %48 = math.rsqrt %47 : vector<8x1xf32>
    %49 = vector.broadcast %48 : vector<8x1xf32> to vector<8x512xf32>
    %50 = arith.mulf %45, %49 : vector<8x512xf32>
    %51 = arith.mulf %29, %50 : vector<8x512xf32>
    %cst_22 = arith.constant dense<0.000000e+00> : vector<512xf32>
    %52 = vector.multi_reduction <add>, %51, %cst_22 [0] : vector<8x512xf32> to vector<512xf32>
    %53 = vector.shape_cast %52 : vector<512xf32> to vector<1x512xf32>
    %cst_23 = arith.constant 1.250000e-01 : f32
    %54 = vector.broadcast %cst_23 : f32 to vector<1x512xf32>
    %55 = arith.mulf %53, %54 : vector<1x512xf32>
    %56 = math.absf %55 : vector<1x512xf32>
    %cst_24 = arith.constant 1.000000e+00 : f32
    %57 = vector.broadcast %cst_24 : f32 to vector<1x512xf32>
    %58 = arith.subf %57, %56 : vector<1x512xf32>
    %cst_25 = arith.constant 0.000000e+00 : f32
    %cst_26 = arith.constant 1.000000e+00 : f32
    %59 = vector.broadcast %cst_25 : f32 to vector<1x512xf32>
    %60 = arith.maximumf %59, %58 : vector<1x512xf32>
    %61 = vector.broadcast %cst_26 : f32 to vector<1x512xf32>
    %62 = arith.minimumf %61, %60 : vector<1x512xf32>
    %63 = vector.extract_strided_slice %8 {offsets = [16, 0], sizes = [8, 512], strides = [1, 1]} : vector<24x512xf32> to vector<8x512xf32>
    %c0_27 = arith.constant 0 : index
    %c0_28 = arith.constant 0 : index
    %64 = vector.load %arg5[%c0_27, %c0_28] : memref<8x1xf32, #tpu.memory_space<vmem>>, vector<8x1xf32>
    %65 = vector.broadcast %64 : vector<8x1xf32> to vector<8x512xf32>
    %66 = arith.addf %63, %65 : vector<8x512xf32>
    %67 = vector.broadcast %62 : vector<1x512xf32> to vector<8x512xf32>
    %68 = arith.mulf %67, %66 : vector<8x512xf32>
    %cst_29 = arith.constant 0.000000e+00 : f32
    %69 = vector.broadcast %cst_29 : f32 to vector<8x512xf32>
    %70 = arith.maximumf %68, %69 : vector<8x512xf32>
    %cst_30 = arith.constant dense<0.000000e+00> : vector<8xf32>
    %71 = vector.multi_reduction <add>, %70, %cst_30 [1] : vector<8x512xf32> to vector<8xf32>
    %72 = vector.shape_cast %71 : vector<8xf32> to vector<8x1xf32>
    %cst_31 = arith.constant 0.001953125 : f32
    %73 = vector.broadcast %cst_31 : f32 to vector<8x1xf32>
    %74 = arith.mulf %72, %73 : vector<8x1xf32>
    %75 = vector.broadcast %74 : vector<8x1xf32> to vector<8x512xf32>
    %76 = arith.subf %70, %75 : vector<8x512xf32>
    %77 = arith.mulf %76, %76 : vector<8x512xf32>
    %cst_32 = arith.constant dense<0.000000e+00> : vector<8xf32>
    %78 = vector.multi_reduction <add>, %77, %cst_32 [1] : vector<8x512xf32> to vector<8xf32>
    %79 = vector.shape_cast %78 : vector<8xf32> to vector<8x1xf32>
    %cst_33 = arith.constant 0.001953125 : f32
    %80 = vector.broadcast %cst_33 : f32 to vector<8x1xf32>
    %81 = arith.mulf %79, %80 : vector<8x1xf32>
    %cst_34 = arith.constant 9.99999974E-6 : f32
    %82 = vector.broadcast %cst_34 : f32 to vector<8x1xf32>
    %83 = arith.addf %81, %82 : vector<8x1xf32>
    %84 = math.rsqrt %83 : vector<8x1xf32>
    %85 = vector.broadcast %84 : vector<8x1xf32> to vector<8x512xf32>
    %86 = arith.mulf %76, %85 : vector<8x512xf32>
    %c0_35 = arith.constant 0 : index
    %c0_36 = arith.constant 0 : index
    %c0_37 = arith.constant 0 : index
    %87 = vector.load %arg6[%c0_35, %c0_36, %c0_37] : memref<1x8x512xf32, #tpu.memory_space<vmem>>, vector<1x8x512xf32>
    %88 = vector.shape_cast %87 : vector<1x8x512xf32> to vector<8x512xf32>
    %89 = vector.shape_cast %86 : vector<8x512xf32> to vector<1x8x512xf32>
    tpu.vector_store %arg6[%c0_35, %c0_36, %c0_37], %89 {strides = array<i32>} : memref<1x8x512xf32, #tpu.memory_space<vmem>>, vector<1x8x512xf32>,
    return
  }
  func.func @transform_0(%arg0: i32) -> (i32, i32, i32) {
    %c0_i32 = arith.constant 0 : i32
    %c0_i32_0 = arith.constant 0 : i32
    %c0_i32_1 = arith.constant 0 : i32
    return %arg0, %c0_i32, %c0_i32_0 : i32, i32, i32
  }
  func.func @transform_1(%arg0: i32) -> (i32, i32, i32) {
    %c0_i32 = arith.constant 0 : i32
    %c0_i32_0 = arith.constant 0 : i32
    %c0_i32_1 = arith.constant 0 : i32
    return %arg0, %c0_i32, %c0_i32_0 : i32, i32, i32
  }
  func.func @transform_2(%arg0: i32) -> (i32, i32) {
    %c0_i32 = arith.constant 0 : i32
    %c0_i32_0 = arith.constant 0 : i32
    %c0_i32_1 = arith.constant 0 : i32
    return %c0_i32, %c0_i32_0 : i32, i32
  }
  func.func @transform_3(%arg0: i32) -> (i32, i32) {
    %c0_i32 = arith.constant 0 : i32
    %c0_i32_0 = arith.constant 0 : i32
    %c0_i32_1 = arith.constant 0 : i32
    return %c0_i32, %c0_i32_0 : i32, i32
  }
  func.func @transform_4(%arg0: i32) -> (i32, i32) {
    %c0_i32 = arith.constant 0 : i32
    %c0_i32_0 = arith.constant 0 : i32
    %c0_i32_1 = arith.constant 0 : i32
    return %c0_i32, %c0_i32_0 : i32, i32
  }
  func.func @transform_5(%arg0: i32) -> (i32, i32, i32) {
    %c0_i32 = arith.constant 0 : i32
    %c0_i32_0 = arith.constant 0 : i32
    %c0_i32_1 = arith.constant 0 : i32
    return %arg0, %c0_i32, %c0_i32_0 : i32, i32, i32
  }
}

</mosaic_0001>

<llo_original>
// kernel: tpu_custom_call.1
$region0: #{tpu_custom_call.1}
  #allocation0 [shape = 'u32[]', space=smem, size = 0x4, offset = 0x4, fixed_abs, tag = 'smem constant byte address 0x4 - core index']
  #allocation1 [shape = 'u32[144,128]{1,0:T(1,128)}', space=vmem, size = 0x12000, scoped, tag = 'internal scratch']
  %s0 = inlined_call_operand.vmem [shape: f32[2,4,512], index: 0, kind: input, shape index: {}]
  %s1 = inlined_call_operand.vmem [shape: f32[2,4,512], index: 1, kind: input, shape index: {}]
  %s2 = inlined_call_operand.vmem [shape: f32[24,4], index: 2, kind: input, shape index: {}]
  %s3 = inlined_call_operand.vmem [shape: f32[24,4], index: 3, kind: input, shape index: {}]
  %s4 = inlined_call_operand.vmem [shape: f32[8,1], index: 4, kind: input, shape index: {}]
  %s5 = inlined_call_operand.hbm [shape: f32[2,8,512], index: 5, kind: output, shape index: {}]
  %s6 = sld [smem:[#allocation0]]
  $region53: #{tpu_custom_call.1} parent=0
    _
  %s8 = ssub.s32 1, %s6
  %s9 = scalar_select 0, %s8, %s6
  $region1: #{tpu_custom_call.1} parent=0
    #allocation2 [shape = 'u8[32768]{0}', space=vmem, size = 0x8000, scoped, tag = 'output window, operand 0']
    #allocation3 [shape = 's32[2]{0}', space=sflag, size = 0x8, scoped, tag = 'scoped memory for tpu_custom_call.1']
    %10 = vsyncpa [#allocation3], 0
    %s11 = scalar_lea.sflag [#allocation3], 1
    %12 = vsyncpa %s11, 0
    loop: start=0, step=1, limit=4
    $region2: #{tpu_custom_call.1} parent=1 // loop_pre_header
      _
    $region3: #{tpu_custom_call.1} parent=1 // loop_header
      %s14 = sphi 0, %s18
      %p15 = scmp.ge.s32.totalorder %s14, 4
      %s24 = sphi 0, %s26
      %s27 = sphi 0, %s24
      %s28 = sphi 0, %s27
      %s44 = sphi 0, %s28
      %s50 = sphi 0, %s52
      %s53 = sphi 0, %s50
      %s54 = sphi 0, %s53
      %s70 = sphi 0, %s54
      %s74 = sphi 0, %s74
      %s76 = sphi 0, %s74
      %s77 = sphi 0, %s76
      %s91 = sphi 0, %s77
      %s95 = sphi 0, %s95
      %s97 = sphi 0, %s95
      %s98 = sphi 0, %s97
      %s112 = sphi 0, %s98
      %s116 = sphi 0, %s116
      %s118 = sphi 0, %s116
      %s119 = sphi 0, %s118
      %s133 = sphi 0, %s119
      %s139 = sphi 0, %s141
      %s142 = sphi 0, %s139
      %s143 = sphi 0, %s142
      %s159 = sphi 0, %s143
    $region4: #{tpu_custom_call.1} parent=1 // loop_header_branch
      %17 = sbr.rel (%p15) target = $region8
    $region5: #{tpu_custom_call.1} parent=1 // loop_body
      %s19 = ssub.s32 %s14, 1
      %s20 = ssub.s32 %s14, 2
      %s21 = sadd.s32 %s14, 1
      %s22 = ssub.s32 %s14, %s21
      %p23 = scmp.eq.s32.totalorder %s22, 0
      %s25 = sadd.s32 %s24, 1
      %s26 = scalar_select %p23, %s24, %s25
      %p29 = pneg %p23
      %p30 = scmp.eq.s32.totalorder %s14, 1
      %p31 = por %p29, %p30
      %p32 = scmp.ne.s32.totalorder %s24, %s27
      %p33 = scmp.eq.s32.totalorder %s14, 0
      %p34 = por %p32, %p33
      %p35 = scmp.ne.s32.totalorder %s24, %s27
      %p36 = scmp.eq.s32.totalorder %s19, 1
      %p37 = por %p35, %p36
      %p38 = scmp.ne.s32.totalorder %s27, %s28
      %p39 = scmp.eq.s32.totalorder %s19, 0
      %p40 = por %p38, %p39
      %p41 = scmp.ne.s32.totalorder %s27, %s28
      %p42 = scmp.eq.s32.totalorder %s20, 1
      %p43 = por %p41, %p42
      %p45 = scmp.ne.s32.totalorder %s28, %s44
      %p46 = scmp.eq.s32.totalorder %s20, 0
      %p47 = por %p45, %p46
      %s48 = ssub.s32 %s14, %s21
      %p49 = scmp.eq.s32.totalorder %s48, 0
      %s51 = sadd.s32 %s50, 1
      %s52 = scalar_select %p49, %s50, %s51
      %p55 = pneg %p49
      %p56 = scmp.eq.s32.totalorder %s14, 1
      %p57 = por %p55, %p56
      %p58 = scmp.ne.s32.totalorder %s50, %s53
      %p59 = scmp.eq.s32.totalorder %s14, 0
      %p60 = por %p58, %p59
      %p61 = scmp.ne.s32.totalorder %s50, %s53
      %p62 = scmp.eq.s32.totalorder %s19, 1
      %p63 = por %p61, %p62
      %p64 = scmp.ne.s32.totalorder %s53, %s54
      %p65 = scmp.eq.s32.totalorder %s19, 0
      %p66 = por %p64, %p65
      %p67 = scmp.ne.s32.totalorder %s53, %s54
      %p68 = scmp.eq.s32.totalorder %s20, 1
      %p69 = por %p67, %p68
      %p71 = scmp.ne.s32.totalorder %s54, %s70
      %p72 = scmp.eq.s32.totalorder %s20, 0
      %p73 = por %p71, %p72
      %s75 = sadd.s32 %s74, 1
      %p78 = scmp.eq.s32.totalorder %s14, 1
      %p79 = scmp.ne.s32.totalorder %s74, %s76
      %p80 = scmp.eq.s32.totalorder %s14, 0
      %p81 = por %p79, %p80
      %p82 = scmp.ne.s32.totalorder %s74, %s76
      %p83 = scmp.eq.s32.totalorder %s19, 1
      %p84 = por %p82, %p83
      %p85 = scmp.ne.s32.totalorder %s76, %s77
      %p86 = scmp.eq.s32.totalorder %s19, 0
      %p87 = por %p85, %p86
      %p88 = scmp.ne.s32.totalorder %s76, %s77
      %p89 = scmp.eq.s32.totalorder %s20, 1
      %p90 = por %p88, %p89
      %p92 = scmp.ne.s32.totalorder %s77, %s91
      %p93 = scmp.eq.s32.totalorder %s20, 0
      %p94 = por %p92, %p93
      %s96 = sadd.s32 %s95, 1
      %p99 = scmp.eq.s32.totalorder %s14, 1
      %p100 = scmp.ne.s32.totalorder %s95, %s97
      %p101 = scmp.eq.s32.totalorder %s14, 0
      %p102 = por %p100, %p101
      %p103 = scmp.ne.s32.totalorder %s95, %s97
      %p104 = scmp.eq.s32.totalorder %s19, 1
      %p105 = por %p103, %p104
      %p106 = scmp.ne.s32.totalorder %s97, %s98
      %p107 = scmp.eq.s32.totalorder %s19, 0
      %p108 = por %p106, %p107
      %p109 = scmp.ne.s32.totalorder %s97, %s98
      %p110 = scmp.eq.s32.totalorder %s20, 1
      %p111 = por %p109, %p110
      %p113 = scmp.ne.s32.totalorder %s98, %s112
      %p114 = scmp.eq.s32.totalorder %s20, 0
      %p115 = por %p113, %p114
      %s117 = sadd.s32 %s116, 1
      %p120 = scmp.eq.s32.totalorder %s14, 1
      %p121 = scmp.ne.s32.totalorder %s116, %s118
      %p122 = scmp.eq.s32.totalorder %s14, 0
      %p123 = por %p121, %p122
      %p124 = scmp.ne.s32.totalorder %s116, %s118
      %p125 = scmp.eq.s32.totalorder %s19, 1
      %p126 = por %p124, %p125
      %p127 = scmp.ne.s32.totalorder %s118, %s119
      %p128 = scmp.eq.s32.totalorder %s19, 0
      %p129 = por %p127, %p128
      %p130 = scmp.ne.s32.totalorder %s118, %s119
      %p131 = scmp.eq.s32.totalorder %s20, 1
      %p132 = por %p130, %p131
      %p134 = scmp.ne.s32.totalorder %s119, %s133
      %p135 = scmp.eq.s32.totalorder %s20, 0
      %p136 = por %p134, %p135
      %s137 = ssub.s32 %s14, %s21
      %p138 = scmp.eq.s32.totalorder %s137, 0
      %s140 = sadd.s32 %s139, 1
      %s141 = scalar_select %p138, %s139, %s140
      %p144 = pneg %p138
      %p145 = scmp.eq.s32.totalorder %s14, 1
      %p146 = por %p144, %p145
      %p147 = scmp.ne.s32.totalorder %s139, %s142
      %p148 = scmp.eq.s32.totalorder %s14, 0
      %p149 = por %p147, %p148
      %p150 = scmp.ne.s32.totalorder %s139, %s142
      %p151 = scmp.eq.s32.totalorder %s19, 1
      %p152 = por %p150, %p151
      %p153 = scmp.ne.s32.totalorder %s142, %s143
      %p154 = scmp.eq.s32.totalorder %s19, 0
      %p155 = por %p153, %p154
      %p156 = scmp.ne.s32.totalorder %s142, %s143
      %p157 = scmp.eq.s32.totalorder %s20, 1
      %p158 = por %p156, %p157
      %p160 = scmp.ne.s32.totalorder %s143, %s159
      %p161 = scmp.eq.s32.totalorder %s20, 0
      %p162 = por %p160, %p161
      %p163 = scmp.le.s32.totalorder 1, %s14
      %p164 = scmp.lt.s32.totalorder %s14, 3
      %p165 = pnand %p163, %p164
      %p166 = pneg %p165
      // Predicated region
      $region9: #{tpu_custom_call.1} parent=5 // pred_check
        _
      $region10: #{tpu_custom_call.1} parent=5 // pred_check_branch
        %168 = sbr.rel (%p165) target = $region12
      $region11: #{tpu_custom_call.1} parent=5 // pred_region
        %s169 = ssub.s32 %s14, 1
        // Predicated region
        $region13: #{tpu_custom_call.1} parent=11 // pred_check
          %p170 = pneg %p87
        $region14: #{tpu_custom_call.1} parent=11 // pred_check_branch
          %172 = sbr.rel (%p170) target = $region16
        $region15: #{tpu_custom_call.1} parent=11 // pred_region
          _
        $region16: #{tpu_custom_call.1} parent=11 // pred_fallthru
          _
        // Predicated region
        $region17: #{tpu_custom_call.1} parent=11 // pred_check
          %p173 = pneg %p108
        $region18: #{tpu_custom_call.1} parent=11 // pred_check_branch
          %175 = sbr.rel (%p173) target = $region20
        $region19: #{tpu_custom_call.1} parent=11 // pred_region
          _
        $region20: #{tpu_custom_call.1} parent=11 // pred_fallthru
          _
        // Predicated region
        $region21: #{tpu_custom_call.1} parent=11 // pred_check
          %p176 = pneg %p129
        $region22: #{tpu_custom_call.1} parent=11 // pred_check_branch
          %178 = sbr.rel (%p176) target = $region24
        $region23: #{tpu_custom_call.1} parent=11 // pred_region
          _
        $region24: #{tpu_custom_call.1} parent=11 // pred_fallthru
          _
      $region12: #{tpu_custom_call.1} parent=5 // pred_fallthru
        _
      %p179 = scmp.lt.s32.totalorder %s14, 2
      // Predicated region
      $region25: #{tpu_custom_call.1} parent=5 // pred_check
        %p180 = pneg %p179
      $region26: #{tpu_custom_call.1} parent=5 // pred_check_branch
        %182 = sbr.rel (%p180) target = $region28
      $region27: #{tpu_custom_call.1} parent=5 // pred_region
        // Predicated region
        $region29: #{tpu_custom_call.1} parent=27 // pred_check
          %p183 = pneg %p34
        $region30: #{tpu_custom_call.1} parent=27 // pred_check_branch
          %185 = sbr.rel (%p183) target = $region32
        $region31: #{tpu_custom_call.1} parent=27 // pred_region
          %p186 = scmp.lt.s32.totalorder %s14, 1
          %s187 = scalar_select %p186, %s14, 1
          %s188 = smul.addr %s187, 4
          %s189 = smul.addr %s188, 4
          %s190 = scalar_lea.vmem %s0, %s189
        $region32: #{tpu_custom_call.1} parent=27 // pred_fallthru
          _
        // Predicated region
        $region33: #{tpu_custom_call.1} parent=27 // pred_check
          %p191 = pneg %p60
        $region34: #{tpu_custom_call.1} parent=27 // pred_check_branch
          %193 = sbr.rel (%p191) target = $region36
        $region35: #{tpu_custom_call.1} parent=27 // pred_region
          %p194 = scmp.lt.s32.totalorder %s14, 1
          %s195 = scalar_select %p194, %s14, 1
          %s196 = smul.addr %s195, 4
          %s197 = smul.addr %s196, 4
          %s198 = scalar_lea.vmem %s1, %s197
        $region36: #{tpu_custom_call.1} parent=27 // pred_fallthru
          _
      $region28: #{tpu_custom_call.1} parent=5 // pred_fallthru
        _
      %p199 = scmp.le.s32.totalorder 1, %s14
      %p200 = scmp.lt.s32.totalorder %s14, 3
      %p201 = pnand %p199, %p200
      %p202 = pneg %p201
      // Predicated region
      $region37: #{tpu_custom_call.1} parent=5 // pred_check
        _
      $region38: #{tpu_custom_call.1} parent=5 // pred_check_branch
        %204 = sbr.rel (%p201) target = $region40
      $region39: #{tpu_custom_call.1} parent=5 // pred_region
        %s205 = ssub.s32 %s14, 1
        %p206 = scmp.lt.s32.totalorder %s19, 1
        %s207 = scalar_select %p206, %s19, 1
        %s208 = smul.addr %s207, 4
        %s209 = smul.addr %s208, 4
        %s210 = scalar_lea.vmem %s0, %s209
        %p211 = pneg %p40
        %p212 = pneg %p37
        %p213 = scmp.lt.s32.totalorder %s19, 1
        %s214 = scalar_select %p213, %s19, 1
        %s215 = smul.addr %s214, 4
        %s216 = smul.addr %s215, 4
        %s217 = scalar_lea.vmem %s1, %s216
        %p218 = pneg %p66
        %p219 = pneg %p63
        %p220 = pneg %p87
        %p221 = pneg %p84
        %p222 = pneg %p108
        %p223 = pneg %p105
        %p224 = pneg %p129
        %p225 = pneg %p126
        %p226 = pneg %p155
        %p227 = pneg %p152
        %s228 = sand.u32 %s142, 1
        %s229 = scalar_lea.sflag [#allocation3], %s228
        %s230 = sand.u32 %s142, 1
        %s231 = smul.addr %s230, 32
        %s232 = scalar_lea.vmem [#allocation2], %s231
        %p233 = scmp.lt.s32.totalorder %s19, 1
        %s234 = scalar_select %p233, %s19, 1
        %s235 = smul.addr %s234, 4
        %s236 = smul.addr %s235, 4
        %s237 = scalar_lea.vmem %s0, %s236
        %p238 = scmp.lt.s32.totalorder %s19, 1
        %s239 = scalar_select %p238, %s19, 1
        %s240 = smul.addr %s239, 4
        %s241 = smul.addr %s240, 4
        %s242 = scalar_lea.vmem %s1, %s241
        %v243 = vld [vmem:[%s237] sm:$0xff]
        %v244 = vld [vmem:[%s237 + $0x8] sm:$0xff]
        %v245 = vld [vmem:[%s242] sm:$0xff]
        %v246 = vld [vmem:[%s242 + $0x8] sm:$0xff]
        %v247 = vld [vmem:[%s2] sm:$0xff]
        %v248 = vld [vmem:[%s2 + $0x8] sm:$0xff]
        %v249 = vld [vmem:[%s2 + $0x10] sm:$0xff]
        %v250 = vld [vmem:[%s3] sm:$0xff]
        %v251 = vld [vmem:[%s3 + $0x8] sm:$0xff]
        %v252 = vld [vmem:[%s3 + $0x10] sm:$0xff]
        %v255 = vcombine.high %v245, %v245
        %v256 = vcombine.high %v246, %v246
        %vm257 = vcmask 31744
        %v259 = vsel %vm257, %v250, 0
        %v262 = vsel %vm257, %v251, 0
        %v265 = vsel %vm257, %v252, 0
        %vm267 = vcmask 1043456
        %v268 = vsel %vm267, %v245, 0
        %v270 = vsel %vm267, %v255, 0
        %v272 = vsel %vm267, %v246, 0
        %v274 = vsel %vm267, %v256, 0
        %276 = vmatprep.subr.mxu0 %v270
        %277 = vmatpush1.msra.mxu0 %v268
        %278 = vmatprep.subr.mxu0 0.0
        %279 = vmatpush1.msra.mxu0 0.0
        %280 = vmatprep.subr.mxu0 0.0
        %281 = vmatpush1.msra.mxu0 0.0
        %282 = vmatprep.subr.mxu0 0.0
        %283 = vmatpush1.msra.mxu0 0.0
        %284 = vmatprep.subr.mxu0 0.0
        %285 = vmatpush1.msra.mxu0 0.0
        %286 = vmatprep.subr.mxu0 0.0
        %287 = vmatpush1.msra.mxu0 0.0
        %288 = vmatprep.subr.mxu0 0.0
        %289 = vmatpush1.msra.mxu0 0.0
        %290 = vmatprep.subr.mxu0 0.0
        %291 = vmatpush1.msra.mxu0 0.0
        %292 = vmatprep.subr.mxu0 0.0
        %293 = vmatpush1.msra.mxu0 0.0
        %294 = vmatprep.subr.mxu0 0.0
        %295 = vmatpush1.msra.mxu0 0.0
        %296 = vmatprep.subr.mxu0 0.0
        %297 = vmatpush1.msra.mxu0 0.0
        %298 = vmatprep.subr.mxu0 0.0
        %299 = vmatpush1.msra.mxu0 0.0
        %300 = vmatprep.subr.mxu0 0.0
        %301 = vmatpush1.msra.mxu0 0.0
        %302 = vmatprep.subr.mxu0 0.0
        %303 = vmatpush1.msra.mxu0 0.0
        %304 = vmatprep.subr.mxu0 0.0
        %305 = vmatpush1.msra.mxu0 0.0
        %306 = vmatprep.subr.mxu0 0.0
        %307 = vmatpush1.msra.mxu0 0.0
        %308 = vmatprep.subr.mxu0 0.0
        %309 = vmatpush1.msra.mxu0 0.0
        %310 = vmatprep.subr.mxu0 0.0
        %311 = vmatpush1.msra.mxu0 0.0
        %312 = vmatprep.subr.mxu0 0.0
        %313 = vmatpush1.msra.mxu0 0.0
        %314 = vmatprep.subr.mxu0 0.0
        %315 = vmatpush1.msra.mxu0 0.0
        %316 = vmatprep.subr.mxu0 0.0
        %317 = vmatpush1.msra.mxu0 0.0
        %318 = vmatprep.subr.mxu0 0.0
        %319 = vmatpush1.msra.mxu0 0.0
        %320 = vmatprep.subr.mxu0 0.0
        %321 = vmatpush1.msra.mxu0 0.0
        %322 = vmatprep.subr.mxu0 0.0
        %323 = vmatpush1.msra.mxu0 0.0
        %324 = vmatprep.subr.mxu0 0.0
        %325 = vmatpush1.msra.mxu0 0.0
        %326 = vmatprep.subr.mxu0 0.0
        %327 = vmatpush1.msra.mxu0 0.0
        %328 = vmatprep.subr.mxu0 0.0
        %329 = vmatpush1.msra.mxu0 0.0
        %330 = vmatprep.subr.mxu0 0.0
        %331 = vmatpush1.msra.mxu0 0.0
        %332 = vmatprep.subr.mxu0 0.0
        %333 = vmatpush1.msra.mxu0 0.0
        %334 = vmatprep.subr.mxu0 0.0
        %335 = vmatpush1.msra.mxu0 0.0
        %336 = vmatprep.subr.mxu0 0.0
        %337 = vmatpush1.msra.mxu0 0.0
        %338 = vmatprep.subr.mxu0 0.0
        %339 = vmatpush1.msra.mxu0 0.0
        %340 = vmatprep.mubr.f32.mxu0 0.0
        %341 = vmatmul.mubr.f32.gmra.mrb[0].mxu0 %v259
        %v342 = vpop.f32.mrb[0].mxu0
        %v343 = vadd.f32 0.0, %v342
        %v344 = vpop.f32.mrb[0].mxu0
        %v345 = vadd.f32 0.0, %v344
        %346 = vmatprep.mubr.f32.mxu0 0.0
        %347 = vmatmul.mubr.f32.gmra.mrb[0].mxu0 %v262
        %v348 = vpop.f32.mrb[0].mxu0
        %v349 = vadd.f32 0.0, %v348
        %v350 = vpop.f32.mrb[0].mxu0
        %v351 = vadd.f32 0.0, %v350
        %352 = vmatprep.mubr.f32.mxu0 0.0
        %353 = vmatmul.mubr.f32.gmra.mrb[0].mxu0 %v265
        %v354 = vpop.f32.mrb[0].mxu0
        %v355 = vadd.f32 0.0, %v354
        %v356 = vpop.f32.mrb[0].mxu0
        %v357 = vadd.f32 0.0, %v356
        %358 = vdwg.mxu0
        %359 = vmatprep.subr.mxu0 %v274
        %360 = vmatpush1.msra.mxu0 %v272
        %361 = vmatprep.subr.mxu0 0.0
        %362 = vmatpush1.msra.mxu0 0.0
        %363 = vmatprep.subr.mxu0 0.0
        %364 = vmatpush1.msra.mxu0 0.0
        %365 = vmatprep.subr.mxu0 0.0
        %366 = vmatpush1.msra.mxu0 0.0
        %367 = vmatprep.subr.mxu0 0.0
        %368 = vmatpush1.msra.mxu0 0.0
        %369 = vmatprep.subr.mxu0 0.0
        %370 = vmatpush1.msra.mxu0 0.0
        %371 = vmatprep.subr.mxu0 0.0
        %372 = vmatpush1.msra.mxu0 0.0
        %373 = vmatprep.subr.mxu0 0.0
        %374 = vmatpush1.msra.mxu0 0.0
        %375 = vmatprep.subr.mxu0 0.0
        %376 = vmatpush1.msra.mxu0 0.0
        %377 = vmatprep.subr.mxu0 0.0
        %378 = vmatpush1.msra.mxu0 0.0
        %379 = vmatprep.subr.mxu0 0.0
        %380 = vmatpush1.msra.mxu0 0.0
        %381 = vmatprep.subr.mxu0 0.0
        %382 = vmatpush1.msra.mxu0 0.0
        %383 = vmatprep.subr.mxu0 0.0
        %384 = vmatpush1.msra.mxu0 0.0
        %385 = vmatprep.subr.mxu0 0.0
        %386 = vmatpush1.msra.mxu0 0.0
        %387 = vmatprep.subr.mxu0 0.0
        %388 = vmatpush1.msra.mxu0 0.0
        %389 = vmatprep.subr.mxu0 0.0
        %390 = vmatpush1.msra.mxu0 0.0
        %391 = vmatprep.subr.mxu0 0.0
        %392 = vmatpush1.msra.mxu0 0.0
        %393 = vmatprep.subr.mxu0 0.0
        %394 = vmatpush1.msra.mxu0 0.0
        %395 = vmatprep.subr.mxu0 0.0
        %396 = vmatpush1.msra.mxu0 0.0
        %397 = vmatprep.subr.mxu0 0.0
        %398 = vmatpush1.msra.mxu0 0.0
        %399 = vmatprep.subr.mxu0 0.0
        %400 = vmatpush1.msra.mxu0 0.0
        %401 = vmatprep.subr.mxu0 0.0
        %402 = vmatpush1.msra.mxu0 0.0
        %403 = vmatprep.subr.mxu0 0.0
        %404 = vmatpush1.msra.mxu0 0.0
        %405 = vmatprep.subr.mxu0 0.0
        %406 = vmatpush1.msra.mxu0 0.0
        %407 = vmatprep.subr.mxu0 0.0
        %408 = vmatpush1.msra.mxu0 0.0
        %409 = vmatprep.subr.mxu0 0.0
        %410 = vmatpush1.msra.mxu0 0.0
        %411 = vmatprep.subr.mxu0 0.0
        %412 = vmatpush1.msra.mxu0 0.0
        %413 = vmatprep.subr.mxu0 0.0
        %414 = vmatpush1.msra.mxu0 0.0
        %415 = vmatprep.subr.mxu0 0.0
        %416 = vmatpush1.msra.mxu0 0.0
        %417 = vmatprep.subr.mxu0 0.0
        %418 = vmatpush1.msra.mxu0 0.0
        %419 = vmatprep.subr.mxu0 0.0
        %420 = vmatpush1.msra.mxu0 0.0
        %421 = vmatprep.subr.mxu0 0.0
        %422 = vmatpush1.msra.mxu0 0.0
        %423 = vmatprep.mubr.f32.mxu0 0.0
        %424 = vmatmul.mubr.f32.gmra.mrb[0].mxu0 %v259
        %v425 = vpop.f32.mrb[0].mxu0
        %v426 = vadd.f32 0.0, %v425
        %v427 = vpop.f32.mrb[0].mxu0
        %v428 = vadd.f32 0.0, %v427
        %429 = vmatprep.mubr.f32.mxu0 0.0
        %430 = vmatmul.mubr.f32.gmra.mrb[0].mxu0 %v262
        %v431 = vpop.f32.mrb[0].mxu0
        %v432 = vadd.f32 0.0, %v431
        %v433 = vpop.f32.mrb[0].mxu0
        %v434 = vadd.f32 0.0, %v433
        %435 = vmatprep.mubr.f32.mxu0 0.0
        %436 = vmatmul.mubr.f32.gmra.mrb[0].mxu0 %v265
        %v437 = vpop.f32.mrb[0].mxu0
        %v438 = vadd.f32 0.0, %v437
        %v439 = vpop.f32.mrb[0].mxu0
        %v440 = vadd.f32 0.0, %v439
        %441 = vdwg.mxu0
        %v444 = vcombine.high %v243, %v243
        %v445 = vcombine.high %v244, %v244
        %v447 = vsel %vm257, %v247, 0
        %v450 = vsel %vm257, %v248, 0
        %v453 = vsel %vm257, %v249, 0
        %v455 = vsel %vm267, %v243, 0
        %v457 = vsel %vm267, %v444, 0
        %v459 = vsel %vm267, %v244, 0
        %v461 = vsel %vm267, %v445, 0
        %463 = vmatprep.subr.mxu0 %v457
        %464 = vmatpush1.msra.mxu0 %v455
        %465 = vmatprep.subr.mxu0 0.0
        %466 = vmatpush1.msra.mxu0 0.0
        %467 = vmatprep.subr.mxu0 0.0
        %468 = vmatpush1.msra.mxu0 0.0
        %469 = vmatprep.subr.mxu0 0.0
        %470 = vmatpush1.msra.mxu0 0.0
        %471 = vmatprep.subr.mxu0 0.0
        %472 = vmatpush1.msra.mxu0 0.0
        %473 = vmatprep.subr.mxu0 0.0
        %474 = vmatpush1.msra.mxu0 0.0
        %475 = vmatprep.subr.mxu0 0.0
        %476 = vmatpush1.msra.mxu0 0.0
        %477 = vmatprep.subr.mxu0 0.0
        %478 = vmatpush1.msra.mxu0 0.0
        %479 = vmatprep.subr.mxu0 0.0
        %480 = vmatpush1.msra.mxu0 0.0
        %481 = vmatprep.subr.mxu0 0.0
        %482 = vmatpush1.msra.mxu0 0.0
        %483 = vmatprep.subr.mxu0 0.0
        %484 = vmatpush1.msra.mxu0 0.0
        %485 = vmatprep.subr.mxu0 0.0
        %486 = vmatpush1.msra.mxu0 0.0
        %487 = vmatprep.subr.mxu0 0.0
        %488 = vmatpush1.msra.mxu0 0.0
        %489 = vmatprep.subr.mxu0 0.0
        %490 = vmatpush1.msra.mxu0 0.0
        %491 = vmatprep.subr.mxu0 0.0
        %492 = vmatpush1.msra.mxu0 0.0
        %493 = vmatprep.subr.mxu0 0.0
        %494 = vmatpush1.msra.mxu0 0.0
        %495 = vmatprep.subr.mxu0 0.0
        %496 = vmatpush1.msra.mxu0 0.0
        %497 = vmatprep.subr.mxu0 0.0
        %498 = vmatpush1.msra.mxu0 0.0
        %499 = vmatprep.subr.mxu0 0.0
        %500 = vmatpush1.msra.mxu0 0.0
        %501 = vmatprep.subr.mxu0 0.0
        %502 = vmatpush1.msra.mxu0 0.0
        %503 = vmatprep.subr.mxu0 0.0
        %504 = vmatpush1.msra.mxu0 0.0
        %505 = vmatprep.subr.mxu0 0.0
        %506 = vmatpush1.msra.mxu0 0.0
        %507 = vmatprep.subr.mxu0 0.0
        %508 = vmatpush1.msra.mxu0 0.0
        %509 = vmatprep.subr.mxu0 0.0
        %510 = vmatpush1.msra.mxu0 0.0
        %511 = vmatprep.subr.mxu0 0.0
        %512 = vmatpush1.msra.mxu0 0.0
        %513 = vmatprep.subr.mxu0 0.0
        %514 = vmatpush1.msra.mxu0 0.0
        %515 = vmatprep.subr.mxu0 0.0
        %516 = vmatpush1.msra.mxu0 0.0
        %517 = vmatprep.subr.mxu0 0.0
        %518 = vmatpush1.msra.mxu0 0.0
        %519 = vmatprep.subr.mxu0 0.0
        %520 = vmatpush1.msra.mxu0 0.0
        %521 = vmatprep.subr.mxu0 0.0
        %522 = vmatpush1.msra.mxu0 0.0
        %523 = vmatprep.subr.mxu0 0.0
        %524 = vmatpush1.msra.mxu0 0.0
        %525 = vmatprep.subr.mxu0 0.0
        %526 = vmatpush1.msra.mxu0 0.0
        %527 = vmatprep.mubr.f32.mxu0 0.0
        %528 = vmatmul.mubr.f32.gmra.mrb[0].mxu0 %v447
        %v529 = vpop.f32.mrb[0].mxu0
        %v530 = vadd.f32 %v343, %v529
        %v531 = vpop.f32.mrb[0].mxu0
        %v532 = vadd.f32 %v345, %v531
        %533 = vmatprep.mubr.f32.mxu0 0.0
        %534 = vmatmul.mubr.f32.gmra.mrb[0].mxu0 %v450
        %v535 = vpop.f32.mrb[0].mxu0
        %v536 = vadd.f32 %v349, %v535
        %v537 = vpop.f32.mrb[0].mxu0
        %v538 = vadd.f32 %v351, %v537
        %539 = vmatprep.mubr.f32.mxu0 0.0
        %540 = vmatmul.mubr.f32.gmra.mrb[0].mxu0 %v453
        %v541 = vpop.f32.mrb[0].mxu0
        %v542 = vadd.f32 %v355, %v541
        %v543 = vpop.f32.mrb[0].mxu0
        %v544 = vadd.f32 %v357, %v543
        %545 = vdwg.mxu0
        %546 = vmatprep.subr.mxu0 %v461
        %547 = vmatpush1.msra.mxu0 %v459
        %548 = vmatprep.subr.mxu0 0.0
        %549 = vmatpush1.msra.mxu0 0.0
        %550 = vmatprep.subr.mxu0 0.0
        %551 = vmatpush1.msra.mxu0 0.0
        %552 = vmatprep.subr.mxu0 0.0
        %553 = vmatpush1.msra.mxu0 0.0
        %554 = vmatprep.subr.mxu0 0.0
        %555 = vmatpush1.msra.mxu0 0.0
        %556 = vmatprep.subr.mxu0 0.0
        %557 = vmatpush1.msra.mxu0 0.0
        %558 = vmatprep.subr.mxu0 0.0
        %559 = vmatpush1.msra.mxu0 0.0
        %560 = vmatprep.subr.mxu0 0.0
        %561 = vmatpush1.msra.mxu0 0.0
        %562 = vmatprep.subr.mxu0 0.0
        %563 = vmatpush1.msra.mxu0 0.0
        %564 = vmatprep.subr.mxu0 0.0
        %565 = vmatpush1.msra.mxu0 0.0
        %566 = vmatprep.subr.mxu0 0.0
        %567 = vmatpush1.msra.mxu0 0.0
        %568 = vmatprep.subr.mxu0 0.0
        %569 = vmatpush1.msra.mxu0 0.0
        %570 = vmatprep.subr.mxu0 0.0
        %571 = vmatpush1.msra.mxu0 0.0
        %572 = vmatprep.subr.mxu0 0.0
        %573 = vmatpush1.msra.mxu0 0.0
        %574 = vmatprep.subr.mxu0 0.0
        %575 = vmatpush1.msra.mxu0 0.0
        %576 = vmatprep.subr.mxu0 0.0
        %577 = vmatpush1.msra.mxu0 0.0
        %578 = vmatprep.subr.mxu0 0.0
        %579 = vmatpush1.msra.mxu0 0.0
        %580 = vmatprep.subr.mxu0 0.0
        %581 = vmatpush1.msra.mxu0 0.0
        %582 = vmatprep.subr.mxu0 0.0
        %583 = vmatpush1.msra.mxu0 0.0
        %584 = vmatprep.subr.mxu0 0.0
        %585 = vmatpush1.msra.mxu0 0.0
        %586 = vmatprep.subr.mxu0 0.0
        %587 = vmatpush1.msra.mxu0 0.0
        %588 = vmatprep.subr.mxu0 0.0
        %589 = vmatpush1.msra.mxu0 0.0
        %590 = vmatprep.subr.mxu0 0.0
        %591 = vmatpush1.msra.mxu0 0.0
        %592 = vmatprep.subr.mxu0 0.0
        %593 = vmatpush1.msra.mxu0 0.0
        %594 = vmatprep.subr.mxu0 0.0
        %595 = vmatpush1.msra.mxu0 0.0
        %596 = vmatprep.subr.mxu0 0.0
        %597 = vmatpush1.msra.mxu0 0.0
        %598 = vmatprep.subr.mxu0 0.0
        %599 = vmatpush1.msra.mxu0 0.0
        %600 = vmatprep.subr.mxu0 0.0
        %601 = vmatpush1.msra.mxu0 0.0
        %602 = vmatprep.subr.mxu0 0.0
        %603 = vmatpush1.msra.mxu0 0.0
        %604 = vmatprep.subr.mxu0 0.0
        %605 = vmatpush1.msra.mxu0 0.0
        %606 = vmatprep.subr.mxu0 0.0
        %607 = vmatpush1.msra.mxu0 0.0
        %608 = vmatprep.subr.mxu0 0.0
        %609 = vmatpush1.msra.mxu0 0.0
        %610 = vmatprep.mubr.f32.mxu0 0.0
        %611 = vmatmul.mubr.f32.gmra.mrb[0].mxu0 %v447
        %v612 = vpop.f32.mrb[0].mxu0
        %v613 = vadd.f32 %v426, %v612
        %v614 = vpop.f32.mrb[0].mxu0
        %v615 = vadd.f32 %v428, %v614
        %616 = vmatprep.mubr.f32.mxu0 0.0
        %617 = vmatmul.mubr.f32.gmra.mrb[0].mxu0 %v450
        %v618 = vpop.f32.mrb[0].mxu0
        %v619 = vadd.f32 %v432, %v618
        %v620 = vpop.f32.mrb[0].mxu0
        %v621 = vadd.f32 %v434, %v620
        %622 = vmatprep.mubr.f32.mxu0 0.0
        %623 = vmatmul.mubr.f32.gmra.mrb[0].mxu0 %v453
        %v624 = vpop.f32.mrb[0].mxu0
        %v625 = vadd.f32 %v438, %v624
        %v626 = vpop.f32.mrb[0].mxu0
        %v627 = vadd.f32 %v440, %v626
        %628 = vdwg.mxu0
        %v629 = vadd.f32 %v530, %v532
        %v630 = vadd.f32 %v629, %v613
        %v631 = vadd.f32 %v630, %v615
        %632 = vadd.xlane.f32.xlu0 %v631
        %v633 = vpop.xlane.xlu0 %632
        %v634 = vmul.f32 %v530, %v530
        %v635 = vmul.f32 %v532, %v532
        %v636 = vmul.f32 %v613, %v613
        %v637 = vmul.f32 %v615, %v615
        %v638 = vadd.f32 %v634, %v635
        %v639 = vadd.f32 %v638, %v636
        %v640 = vadd.f32 %v639, %v637
        %641 = vadd.xlane.f32.xlu0 %v640
        %v642 = vpop.xlane.xlu0 %641
        %v643 = vmul.f32 %v633, 0.001953125
        %v644 = vmul.f32 %v642, 0.001953125
        %v645 = vmul.f32 %v643, %v643
        %v646 = vsub.f32 %v644, %v645
        %v647 = vmax.f32 %v646, 0.0
        %v648 = vsub.f32 %v530, %v643
        %v649 = vsub.f32 %v532, %v643
        %v650 = vsub.f32 %v613, %v643
        %v651 = vsub.f32 %v615, %v643
        %v652 = vadd.f32 %v647, 1e-05
        %v653 = vrsqrt.pop %v652
        %v654 = vmul.f32 %v648, %v653
        %v655 = vmul.f32 %v649, %v653
        %v656 = vmul.f32 %v650, %v653
        %v657 = vmul.f32 %v651, %v653
        %v658 = vadd.f32 %v536, %v538
        %v659 = vadd.f32 %v658, %v619
        %v660 = vadd.f32 %v659, %v621
        %661 = vadd.xlane.f32.xlu0 %v660
        %v662 = vpop.xlane.xlu0 %661
        %v663 = vmul.f32 %v536, %v536
        %v664 = vmul.f32 %v538, %v538
        %v665 = vmul.f32 %v619, %v619
        %v666 = vmul.f32 %v621, %v621
        %v667 = vadd.f32 %v663, %v664
        %v668 = vadd.f32 %v667, %v665
        %v669 = vadd.f32 %v668, %v666
        %670 = vadd.xlane.f32.xlu0 %v669
        %v671 = vpop.xlane.xlu0 %670
        %v672 = vmul.f32 %v662, 0.001953125
        %v673 = vmul.f32 %v671, 0.001953125
        %v674 = vmul.f32 %v672, %v672
        %v675 = vsub.f32 %v673, %v674
        %v676 = vmax.f32 %v675, 0.0
        %v677 = vsub.f32 %v536, %v672
        %v678 = vsub.f32 %v538, %v672
        %v679 = vsub.f32 %v619, %v672
        %v680 = vsub.f32 %v621, %v672
        %v681 = vadd.f32 %v676, 1e-05
        %v682 = vrsqrt.pop %v681
        %v683 = vmul.f32 %v677, %v682
        %v684 = vmul.f32 %v678, %v682
        %v685 = vmul.f32 %v679, %v682
        %v686 = vmul.f32 %v680, %v682
        %v687 = vmul.f32 %v654, %v683
        %v688 = vmul.f32 %v655, %v684
        %v689 = vmul.f32 %v656, %v685
        %v690 = vmul.f32 %v657, %v686
        %v691 = vrot.slane %v687, 4
        %v692 = vadd.f32 %v687, %v691
        %v693 = vrot.slane %v692, 2
        %v694 = vadd.f32 %v692, %v693
        %v695 = vrot.slane %v694, 1
        %v696 = vadd.f32 %v694, %v695
        %v697 = vrot.slane %v688, 4
        %v698 = vadd.f32 %v688, %v697
        %v699 = vrot.slane %v698, 2
        %v700 = vadd.f32 %v698, %v699
        %v701 = vrot.slane %v700, 1
        %v702 = vadd.f32 %v700, %v701
        %v703 = vrot.slane %v689, 4
        %v704 = vadd.f32 %v689, %v703
        %v705 = vrot.slane %v704, 2
        %v706 = vadd.f32 %v704, %v705
        %v707 = vrot.slane %v706, 1
        %v708 = vadd.f32 %v706, %v707
        %v709 = vrot.slane %v690, 4
        %v710 = vadd.f32 %v690, %v709
        %v711 = vrot.slane %v710, 2
        %v712 = vadd.f32 %v710, %v711
        %v713 = vrot.slane %v712, 1
        %v714 = vadd.f32 %v712, %v713
        %v715 = vmul.f32 %v696, 0.125
        %v716 = vmul.f32 %v702, 0.125
        %v717 = vmul.f32 %v708, 0.125
        %v718 = vmul.f32 %v714, 0.125
        %v719 = vand.u32 2147483647, %v715
        %v720 = vand.u32 2147483647, %v716
        %v721 = vand.u32 2147483647, %v717
        %v722 = vand.u32 2147483647, %v718
        %v723 = vsub.f32 1.0, %v719
        %v724 = vsub.f32 1.0, %v720
        %v725 = vsub.f32 1.0, %v721
        %v726 = vsub.f32 1.0, %v722
        %v727 = vmax.f32 %v723, 0.0
        %v728 = vmax.f32 %v724, 0.0
        %v729 = vmax.f32 %v725, 0.0
        %v730 = vmax.f32 %v726, 0.0
        %v731 = vmin.f32 %v727, 1.0
        %v732 = vmin.f32 %v728, 1.0
        %v733 = vmin.f32 %v729, 1.0
        %v734 = vmin.f32 %v730, 1.0
        %v735 = vld [vmem:[%s4] sm:$0xff]
        %737 = vset.pattern.permute.xlu0 0
        %738 = vperm.xlu0 %737, %v735
        %v739 = vpop.permute.xlu0 %738
        %v741 = vadd.f32 %v542, %v739
        %v742 = vadd.f32 %v544, %v739
        %v743 = vadd.f32 %v625, %v739
        %v744 = vadd.f32 %v627, %v739
        %v745 = vmul.f32 %v731, %v741
        %v746 = vmul.f32 %v732, %v742
        %v747 = vmul.f32 %v733, %v743
        %v748 = vmul.f32 %v734, %v744
        %v749 = vmax.f32 %v745, 0.0
        %v750 = vmax.f32 %v746, 0.0
        %v751 = vmax.f32 %v747, 0.0
        %v752 = vmax.f32 %v748, 0.0
        %v753 = vadd.f32 %v749, %v750
        %v754 = vadd.f32 %v753, %v751
        %v755 = vadd.f32 %v754, %v752
        %756 = vadd.xlane.f32.xlu0 %v755
        %v757 = vpop.xlane.xlu0 %756
        %v758 = vmul.f32 %v757, 0.001953125
        %v759 = vsub.f32 %v749, %v758
        %v760 = vsub.f32 %v750, %v758
        %v761 = vsub.f32 %v751, %v758
        %v762 = vsub.f32 %v752, %v758
        %v763 = vmul.f32 %v759, %v759
        %v764 = vmul.f32 %v760, %v760
        %v765 = vmul.f32 %v761, %v761
        %v766 = vmul.f32 %v762, %v762
        %v767 = vadd.f32 %v763, %v764
        %v768 = vadd.f32 %v767, %v765
        %v769 = vadd.f32 %v768, %v766
        %770 = vadd.xlane.f32.xlu0 %v769
        %v771 = vpop.xlane.xlu0 %770
        %v772 = vmul.f32 %v771, 0.001953125
        %v773 = vadd.f32 %v772, 1e-05
        %v774 = vrsqrt.pop %v773
        %v775 = vmul.f32 %v759, %v774
        %v776 = vmul.f32 %v760, %v774
        %v777 = vmul.f32 %v761, %v774
        %v778 = vmul.f32 %v762, %v774
        %779 = vst [vmem:[%s232] sm:$0xff] %v775
        %780 = vst [vmem:[%s232 + $0x8] sm:$0xff] %v776
        %781 = vst [vmem:[%s232 + $0x10] sm:$0xff] %v777
        %782 = vst [vmem:[%s232 + $0x18] sm:$0xff] %v778
        %s783 = sand.u32 %s142, 1
        %s784 = scalar_lea.sflag [#allocation3], %s783
        %s785 = sand.u32 %s142, 1
        %s786 = smul.addr %s785, 32
        %s787 = scalar_lea.vmem [#allocation2], %s786
        // Predicated region
        $region41: #{tpu_custom_call.1} parent=39 // pred_check
          %p788 = pneg %p152
        $region42: #{tpu_custom_call.1} parent=39 // pred_check_branch
          %790 = sbr.rel (%p788) target = $region44
        $region43: #{tpu_custom_call.1} parent=39 // pred_region
          %s792 = ssub.s32 512, 512
          %793 = vsyncadd %s784, %s792
          %s794 = smul.addr %s19, 4
          %s795 = smul.addr %s794, 128
          %s796 = scalar_lea.hbm %s5, %s795
          %s798 = sshll.u32 %s787, 4
          %s799 = int_to_ptr.vmem [resolvable:$true] %s798
          %801 = dma.vmem_to_hbm [thread:$0]  %s799, 512, %s796, %s784
        $region44: #{tpu_custom_call.1} parent=39 // pred_fallthru
          _
      $region40: #{tpu_custom_call.1} parent=5 // pred_fallthru
        _
      %p802 = scmp.le.s32.totalorder 2, %s14
      // Predicated region
      $region45: #{tpu_custom_call.1} parent=5 // pred_check
        %p803 = pneg %p802
      $region46: #{tpu_custom_call.1} parent=5 // pred_check_branch
        %805 = sbr.rel (%p803) target = $region48
      $region47: #{tpu_custom_call.1} parent=5 // pred_region
        %s806 = ssub.s32 %s14, 2
        // Predicated region
        $region49: #{tpu_custom_call.1} parent=47 // pred_check
          %p807 = pneg %p158
        $region50: #{tpu_custom_call.1} parent=47 // pred_check_branch
          %809 = sbr.rel (%p807) target = $region52
        $region51: #{tpu_custom_call.1} parent=47 // pred_region
          %s810 = sand.u32 %s143, 1
          %s811 = scalar_lea.sflag [#allocation3], %s810
          %s812 = sand.u32 %s143, 1
          %s813 = smul.addr %s812, 32
          %s814 = scalar_lea.vmem [#allocation2], %s813
          %815 = dma.done %s811, 512
        $region52: #{tpu_custom_call.1} parent=47 // pred_fallthru
          _
      $region48: #{tpu_custom_call.1} parent=5 // pred_fallthru
        _
    $region6: #{tpu_custom_call.1} parent=1 // loop_footer
      %s18 = sadd.s32 1, %s14
    $region7: #{tpu_custom_call.1} parent=1 // loop_footer_branch
      %13 = sbr.rel target = $region3
    $region8: #{tpu_custom_call.1} parent=1 // loop_exit
      _
    %816 = vsyncpa [#allocation3], 1
    %s817 = scalar_lea.sflag [#allocation3], 1
    %818 = vsyncpa %s817, 1

</llo_original>
